<compile_context>
chip_gen: v7x
topology: tpu7x:2x2x1
jax: 0.10.0
libtpu: 0.0.40
codegen_flags: <defaults>
</compile_context>

<pallas_src>
import functools

import jax
import jax.numpy as jnp
from jax import lax
from jax.experimental import pallas as pl
from jax.experimental.pallas import tpu as pltpu

ALPHA = 0.25      # positive-class weight -> CE weight vector (1-alpha, alpha)
GAMA = 2          # focal exponent (kernel below is specialized for gamma == 2)

LANES = 128
TILE_ROWS = 1024  # rows per (TILE_ROWS, 128) tile; multiple of 8
NUM_CORES = 2     # leading "parallel" grid axis (megacore split on v7x)


def _focal_loss_kernel(pred_ref, tgt_ref, loss_acc_ref, tgt_acc_ref, *,
                       tile_rows, tiles_per_core, n_valid):
    c = pl.program_id(0)   # core split   (parallel)
    b = pl.program_id(1)   # batch        (reduction)
    i = pl.program_id(2)   # row tile     (reduction)

    # Zero this core's resident accumulators on its first reduction step.
    @pl.when(jnp.logical_and(b == 0, i == 0))
    def _():
        loss_acc_ref[...] = jnp.zeros_like(loss_acc_ref)
        tgt_acc_ref[...] = jnp.zeros_like(tgt_acc_ref)

    x0 = pred_ref[0, 0].astype(jnp.float32)     # class-0 logits (tile_rows,128)
    x1 = pred_ref[0, 1].astype(jnp.float32)     # class-1 logits
    t_raw = tgt_ref[0].astype(jnp.float32)      # labels in {0, 1}

    # Tail mask: global flat index inside this batch item's (rows*128) plane.
    row_tile = c * tiles_per_core + i           # intended (unclamped) row tile
    local_row = lax.broadcasted_iota(jnp.int32, (tile_rows, LANES), 0)
    lane = lax.broadcasted_iota(jnp.int32, (tile_rows, LANES), 1)
    flat = (row_tile * tile_rows + local_row) * LANES + lane
    mask = flat < n_valid

    t = jnp.where(mask, t_raw, 0.0)

    # Weighted 2-class cross-entropy + focal term via d = x1 - x0:
    #   log p_true = -softplus(s),  s = d if t == 0 else -d
    d = x1 - x0
    s = (1.0 - 2.0 * t) * d
    sp = jnp.maximum(s, 0.0) + jnp.log(1.0 + jnp.exp(-jnp.abs(s)))  # softplus(s)
    w = t * ALPHA + (1.0 - t) * (1.0 - ALPHA)
    ce = w * sp                                  # -w * log p_true
    p_t = jnp.exp(-sp)                           # prob of the true class
    q = 1.0 - p_t
    loss = ce * q * q                            # * (1 - p_t)**2  (gamma = 2)

    # Per-lane accumulation (pure VALU); cross-lane reduce happens once outside.
    loss_acc_ref[...] += jnp.where(mask, loss, 0.0)
    tgt_acc_ref[...] += t


def focal_loss(pred, target, *, tile_rows=TILE_ROWS):
    """pred: (B, 2, D, H, W) logits; target: (B, D, H, W) labels in {0, 1}."""
    B, C, D, H, W = pred.shape
    assert C == 2, "FocalLoss expects 2 classes along dim 1"
    n = D * H * W              # valid elements per batch item
    n_total = B * n

    # Free (contiguous) reshapes — no channel slicing, no extra HBM passes.
    pred3 = pred.reshape(B, 2, n)
    tgt2 = target.reshape(B, n)

    # Only ragged shapes (n not a multiple of 8*128) need a real pad; padded
    # elements are killed by the in-kernel mask so the pad value is irrelevant.
    chunk = 8 * LANES
    n_pad = ((n + chunk - 1) // chunk) * chunk
    if n_pad != n:
        pred3 = jnp.pad(pred3, ((0, 0), (0, 0), (0, n_pad - n)))
        tgt2 = jnp.pad(tgt2, ((0, 0), (0, n_pad - n)))

    rows = n_pad // LANES                       # multiple of 8
    pred4 = pred3.reshape(B, 2, rows, LANES)
    tgt3 = tgt2.reshape(B, rows, LANES)

    tile_r = min(tile_rows, rows)               # multiple of 8, <= rows
    num_tiles = pl.cdiv(rows, tile_r)
    tiles_per_core = pl.cdiv(num_tiles, NUM_CORES)

    def pred_map(c, b, i):
        rt = jnp.minimum(c * tiles_per_core + i, num_tiles - 1)
        return (b, 0, rt, 0)

    def tgt_map(c, b, i):
        rt = jnp.minimum(c * tiles_per_core + i, num_tiles - 1)
        return (b, rt, 0)

    out_spec = pl.BlockSpec((tile_r, LANES), lambda c, b, i: (c, 0))
    out_sds = jax.ShapeDtypeStruct((NUM_CORES * tile_r, LANES), jnp.float32)

    kernel = functools.partial(
        _focal_loss_kernel, tile_rows=tile_r, tiles_per_core=tiles_per_core,
        n_valid=n)

    loss_part, tgt_part = pl.pallas_call(
        kernel,
        out_shape=(out_sds, out_sds),
        grid_spec=pltpu.PrefetchScalarGridSpec(
            num_scalar_prefetch=0,
            grid=(NUM_CORES, B, tiles_per_core),
            in_specs=[pl.BlockSpec((1, 2, tile_r, LANES), pred_map),
                      pl.BlockSpec((1, tile_r, LANES), tgt_map)],
            out_specs=(out_spec, out_spec)),
        compiler_params=pltpu.CompilerParams(
            dimension_semantics=("parallel", "arbitrary", "arbitrary")),
    )(pred4, tgt3)

    # Tiny final reductions (2*tile_r*128 f32 elements) + normalization.
    loss_sum = loss_part.sum()
    num_target = tgt_part.sum()
    denom = jnp.where(num_target > 0, num_target, jnp.float32(n_total))
    return loss_sum / denom


def focal_loss_ref(pred, target):
    """Pure-JAX reference mirroring the PyTorch module."""
    logp = jax.nn.log_softmax(pred, axis=1)
    p1 = jnp.exp(logp[:, 1])
    t = target.astype(jnp.float32)
    w = jnp.where(target == 1, ALPHA, 1.0 - ALPHA)
    logp_t = jnp.where(target == 1, logp[:, 1], logp[:, 0])
    ce = -w * logp_t
    p_t = p1 * t + (1.0 - p1) * (1.0 - t)
    loss = ce * (1.0 - p_t) ** GAMA
    num_target = t.sum()
    return jnp.where(num_target == 0.0, loss.mean(), loss.sum() / num_target)


if __name__ == "__main__":
    key = jax.random.PRNGKey(0)
    k1, k2 = jax.random.split(key)

    B, C, D, H, W = 2, 2, 4, 16, 16
    pred = jax.random.normal(k1, (B, C, D, H, W), dtype=jnp.float32)
    target = jax.random.bernoulli(k2, p=0.3, shape=(B, D, H, W)).astype(jnp.int32)

    out = jax.block_until_ready(focal_loss(pred, target))
    ref = jax.block_until_ready(focal_loss_ref(pred, target))

    assert jnp.isfinite(out), "non-finite kernel output"
    assert jnp.allclose(out, ref, rtol=5e-5, atol=1e-6), (out, ref)
    print("KERNEL_OK")
</pallas_src>

<mosaic_0001>
module attributes {stable_mosaic.version = 11 : i64} {
  func.func @_focal_loss_kernel(%arg0: i32, %arg1: i32, %arg2: i32, %arg3: memref<1x2x8x128xf32, #tpu.memory_space<vmem>>, %arg4: memref<1x8x128xi32, #tpu.memory_space<vmem>>, %arg5: memref<8x128xf32, #tpu.memory_space<vmem>>, %arg6: memref<8x128xf32, #tpu.memory_space<vmem>>) attributes {dimension_semantics = [#tpu.dimension_semantics<parallel>, #tpu.dimension_semantics<arbitrary>, #tpu.dimension_semantics<arbitrary>], iteration_bounds = array<i64: 2, 2, 1>, scalar_prefetch = 0 : i64, scratch_operands = 0 : i64, tpu.core_type = #tpu.core_type<tc>, window_params = [{transform_indices = @transform_0, window_bounds = array<i64: 1, 2, 8, 128>}, {transform_indices = @transform_1, window_bounds = array<i64: 1, 8, 128>}, {transform_indices = @transform_2, window_bounds = array<i64: 8, 128>}, {transform_indices = @transform_3, window_bounds = array<i64: 8, 128>}]} {
    %c0_i32 = arith.constant 0 : i32
    %0 = arith.cmpi eq, %arg1, %c0_i32 : i32
    %c0_i32_0 = arith.constant 0 : i32
    %1 = arith.cmpi eq, %arg2, %c0_i32_0 : i32
    %2 = arith.andi %0, %1 : i1
    %3 = arith.extui %2 : i1 to i32
    %c0_i32_1 = arith.constant 0 : i32
    %4 = arith.cmpi ne, %3, %c0_i32_1 : i32
    scf.if %4 {
      %cst_30 = arith.constant 0.000000e+00 : f32
      %65 = vector.broadcast %cst_30 : f32 to vector<8x128xf32>
      %c0_31 = arith.constant 0 : index
      %c0_32 = arith.constant 0 : index
      %66 = vector.load %arg5[%c0_31, %c0_32] : memref<8x128xf32, #tpu.memory_space<vmem>>, vector<8x128xf32>
      tpu.vector_store %arg5[%c0_31, %c0_32], %65 {strides = array<i32>} : memref<8x128xf32, #tpu.memory_space<vmem>>, vector<8x128xf32>,
      %cst_33 = arith.constant 0.000000e+00 : f32
      %67 = vector.broadcast %cst_33 : f32 to vector<8x128xf32>
      %c0_34 = arith.constant 0 : index
      %c0_35 = arith.constant 0 : index
      %68 = vector.load %arg6[%c0_34, %c0_35] : memref<8x128xf32, #tpu.memory_space<vmem>>, vector<8x128xf32>
      tpu.vector_store %arg6[%c0_34, %c0_35], %67 {strides = array<i32>} : memref<8x128xf32, #tpu.memory_space<vmem>>, vector<8x128xf32>,
    } else {
    }
    %c0 = arith.constant 0 : index
    %c0_2 = arith.constant 0 : index
    %c0_3 = arith.constant 0 : index
    %c0_4 = arith.constant 0 : index
    %5 = vector.load %arg3[%c0, %c0_2, %c0_3, %c0_4] : memref<1x2x8x128xf32, #tpu.memory_space<vmem>>, vector<1x1x8x128xf32>
    %6 = vector.shape_cast %5 : vector<1x1x8x128xf32> to vector<8x128xf32>
    %c0_5 = arith.constant 0 : index
    %c1 = arith.constant 1 : index
    %c0_6 = arith.constant 0 : index
    %c0_7 = arith.constant 0 : index
    %7 = vector.load %arg3[%c0_5, %c1, %c0_6, %c0_7] : memref<1x2x8x128xf32, #tpu.memory_space<vmem>>, vector<1x1x8x128xf32>
    %8 = vector.shape_cast %7 : vector<1x1x8x128xf32> to vector<8x128xf32>
    %c0_8 = arith.constant 0 : index
    %c0_9 = arith.constant 0 : index
    %c0_10 = arith.constant 0 : index
    %9 = vector.load %arg4[%c0_8, %c0_9, %c0_10] : memref<1x8x128xi32, #tpu.memory_space<vmem>>, vector<1x8x128xi32>
    %10 = vector.shape_cast %9 : vector<1x8x128xi32> to vector<8x128xi32>
    %11 = arith.sitofp %10 : vector<8x128xi32> to vector<8x128xf32>
    %c1_i32 = arith.constant 1 : i32
    %12 = arith.muli %arg0, %c1_i32 : i32
    %13 = arith.addi %12, %arg2 : i32
    %14 = tpu.iota {dimensions = array<i32: 0>} : vector<8x128xi32>
    %15 = tpu.iota {dimensions = array<i32: 1>} : vector<8x128xi32>
    %c8_i32 = arith.constant 8 : i32
    %16 = arith.muli %13, %c8_i32 : i32
    %17 = vector.broadcast %16 : i32 to vector<8x128xi32>
    %18 = arith.addi %17, %14 : vector<8x128xi32>
    %c128_i32 = arith.constant 128 : i32
    %19 = vector.broadcast %c128_i32 : i32 to vector<8x128xi32>
    %20 = arith.muli %18, %19 : vector<8x128xi32>
    %21 = arith.addi %20, %15 : vector<8x128xi32>
    %c1024_i32 = arith.constant 1024 : i32
    %22 = vector.broadcast %c1024_i32 : i32 to vector<8x128xi32>
    %23 = arith.cmpi slt, %21, %22 : vector<8x128xi32>
    %cst = arith.constant 0.000000e+00 : f32
    %24 = vector.broadcast %cst : f32 to vector<8x128xf32>
    %25 = arith.select %23, %11, %24 : vector<8x128xi1>, vector<8x128xf32>
    %26 = arith.subf %8, %6 : vector<8x128xf32>
    %cst_11 = arith.constant 2.000000e+00 : f32
    %27 = vector.broadcast %cst_11 : f32 to vector<8x128xf32>
    %28 = arith.mulf %27, %25 : vector<8x128xf32>
    %cst_12 = arith.constant 1.000000e+00 : f32
    %29 = vector.broadcast %cst_12 : f32 to vector<8x128xf32>
    %30 = arith.subf %29, %28 : vector<8x128xf32>
    %31 = arith.mulf %30, %26 : vector<8x128xf32>
    %cst_13 = arith.constant 0.000000e+00 : f32
    %32 = vector.broadcast %cst_13 : f32 to vector<8x128xf32>
    %33 = arith.maximumf %31, %32 : vector<8x128xf32>
    %34 = math.absf %31 : vector<8x128xf32>
    %cst_14 = arith.constant 0.000000e+00 : f32
    %35 = vector.broadcast %cst_14 : f32 to vector<8x128xf32>
    %36 = arith.subf %35, %34 : vector<8x128xf32>
    %37 = math.exp %36 : vector<8x128xf32>
    %cst_15 = arith.constant 1.000000e+00 : f32
    %38 = vector.broadcast %cst_15 : f32 to vector<8x128xf32>
    %39 = arith.addf %38, %37 : vector<8x128xf32>
    %40 = math.log %39 : vector<8x128xf32>
    %41 = arith.addf %33, %40 : vector<8x128xf32>
    %cst_16 = arith.constant 2.500000e-01 : f32
    %42 = vector.broadcast %cst_16 : f32 to vector<8x128xf32>
    %43 = arith.mulf %25, %42 : vector<8x128xf32>
    %cst_17 = arith.constant 1.000000e+00 : f32
    %44 = vector.broadcast %cst_17 : f32 to vector<8x128xf32>
    %45 = arith.subf %44, %25 : vector<8x128xf32>
    %cst_18 = arith.constant 7.500000e-01 : f32
    %46 = vector.broadcast %cst_18 : f32 to vector<8x128xf32>
    %47 = arith.mulf %45, %46 : vector<8x128xf32>
    %48 = arith.addf %43, %47 : vector<8x128xf32>
    %49 = arith.mulf %48, %41 : vector<8x128xf32>
    %cst_19 = arith.constant 0.000000e+00 : f32
    %50 = vector.broadcast %cst_19 : f32 to vector<8x128xf32>
    %51 = arith.subf %50, %41 : vector<8x128xf32>
    %52 = math.exp %51 : vector<8x128xf32>
    %cst_20 = arith.constant 1.000000e+00 : f32
    %53 = vector.broadcast %cst_20 : f32 to vector<8x128xf32>
    %54 = arith.subf %53, %52 : vector<8x128xf32>
    %55 = arith.mulf %49, %54 : vector<8x128xf32>
    %56 = arith.mulf %55, %54 : vector<8x128xf32>
    %c0_21 = arith.constant 0 : index
    %c0_22 = arith.constant 0 : index
    %57 = vector.load %arg5[%c0_21, %c0_22] : memref<8x128xf32, #tpu.memory_space<vmem>>, vector<8x128xf32>
    %cst_23 = arith.constant 0.000000e+00 : f32
    %58 = vector.broadcast %cst_23 : f32 to vector<8x128xf32>
    %59 = arith.select %23, %56, %58 : vector<8x128xi1>, vector<8x128xf32>
    %60 = arith.addf %57, %59 : vector<8x128xf32>
    %c0_24 = arith.constant 0 : index
    %c0_25 = arith.constant 0 : index
    %61 = vector.load %arg5[%c0_24, %c0_25] : memref<8x128xf32, #tpu.memory_space<vmem>>, vector<8x128xf32>
    tpu.vector_store %arg5[%c0_24, %c0_25], %60 {strides = array<i32>} : memref<8x128xf32, #tpu.memory_space<vmem>>, vector<8x128xf32>,
    %c0_26 = arith.constant 0 : index
    %c0_27 = arith.constant 0 : index
    %62 = vector.load %arg6[%c0_26, %c0_27] : memref<8x128xf32, #tpu.memory_space<vmem>>, vector<8x128xf32>
    %63 = arith.addf %62, %25 : vector<8x128xf32>
    %c0_28 = arith.constant 0 : index
    %c0_29 = arith.constant 0 : index
    %64 = vector.load %arg6[%c0_28, %c0_29] : memref<8x128xf32, #tpu.memory_space<vmem>>, vector<8x128xf32>
    tpu.vector_store %arg6[%c0_28, %c0_29], %63 {strides = array<i32>} : memref<8x128xf32, #tpu.memory_space<vmem>>, vector<8x128xf32>,
    return
  }
  func.func @transform_0(%arg0: i32, %arg1: i32, %arg2: i32) -> (i32, i32, i32, i32) {
    %c1_i32 = arith.constant 1 : i32
    %0 = arith.muli %arg0, %c1_i32 : i32
    %1 = arith.addi %0, %arg2 : i32
    %c0_i32 = arith.constant 0 : i32
    %2 = arith.minsi %1, %c0_i32 : i32
    %c0_i32_0 = arith.constant 0 : i32
    %c0_i32_1 = arith.constant 0 : i32
    %c0_i32_2 = arith.constant 0 : i32
    return %arg1, %c0_i32_0, %2, %c0_i32_1 : i32, i32, i32, i32
  }
  func.func @transform_1(%arg0: i32, %arg1: i32, %arg2: i32) -> (i32, i32, i32) {
    %c1_i32 = arith.constant 1 : i32
    %0 = arith.muli %arg0, %c1_i32 : i32
    %1 = arith.addi %0, %arg2 : i32
    %c0_i32 = arith.constant 0 : i32
    %2 = arith.minsi %1, %c0_i32 : i32
    %c0_i32_0 = arith.constant 0 : i32
    %c0_i32_1 = arith.constant 0 : i32
    return %arg1, %2, %c0_i32_0 : i32, i32, i32
  }
  func.func @transform_2(%arg0: i32, %arg1: i32, %arg2: i32) -> (i32, i32) {
    %c0_i32 = arith.constant 0 : i32
    %c0_i32_0 = arith.constant 0 : i32
    return %arg0, %c0_i32 : i32, i32
  }
  func.func @transform_3(%arg0: i32, %arg1: i32, %arg2: i32) -> (i32, i32) {
    %c0_i32 = arith.constant 0 : i32
    %c0_i32_0 = arith.constant 0 : i32
    return %arg0, %c0_i32 : i32, i32
  }
}

</mosaic_0001>

<llo_original>
// kernel: tpu_custom_call.1
$region0: #{tpu_custom_call.1}
  #allocation0 [shape = 'u32[]', space=smem, size = 0x4, offset = 0x4, fixed_abs, tag = 'smem constant byte address 0x4 - core index']
  #allocation1 [shape = 'u32[144,128]{1,0:T(1,128)}', space=vmem, size = 0x12000, scoped, tag = 'internal scratch']
  %s0 = inlined_call_operand.hbm [shape: f32[2,2,8,128], index: 0, kind: input, shape index: {}]
  %s1 = inlined_call_operand.hbm [shape: s32[2,8,128], index: 1, kind: input, shape index: {}]
  %s2 = inlined_call_operand.hbm [shape: f32[16,128], index: 2, kind: output, shape index: {0}]
  %s3 = inlined_call_operand.hbm [shape: f32[16,128], index: 3, kind: output, shape index: {1}]
  %4 = xla_tuple %s2, %s3
  %s5 = sld [smem:[#allocation0]]
  $region61: #{tpu_custom_call.1} parent=0
    _
  %s7 = ssub.s32 1, %s5
  %s8 = scalar_select 0, %s7, %s5
  $region1: #{tpu_custom_call.1} parent=0
    #allocation2 [shape = 'u8[16384]{0}', space=vmem, size = 0x4000, scoped, tag = 'input window, operand 0']
    #allocation3 [shape = 's32[2]{0}', space=sflag, size = 0x8, scoped, tag = 'scoped memory for tpu_custom_call.1']
    #allocation4 [shape = 's32[2]{0}', space=sflag, size = 0x8, scoped, tag = 'scoped memory for tpu_custom_call.1']
    #allocation5 [shape = 'u8[8192]{0}', space=vmem, size = 0x2000, scoped, tag = 'input window, operand 1']
    #allocation6 [shape = 's32[2]{0}', space=sflag, size = 0x8, scoped, tag = 'scoped memory for tpu_custom_call.1']
    #allocation7 [shape = 'u8[8192]{0}', space=vmem, size = 0x2000, scoped, tag = 'output window, operand 0']
    #allocation8 [shape = 'u8[8192]{0}', space=vmem, size = 0x2000, scoped, tag = 'output window, operand 1']
    #allocation9 [shape = 's32[2]{0}', space=sflag, size = 0x8, scoped, tag = 'scoped memory for tpu_custom_call.1']
    %9 = vsyncpa [#allocation3], 0
    %s10 = scalar_lea.sflag [#allocation3], 1
    %11 = vsyncpa %s10, 0
    %12 = vsyncpa [#allocation6], 0
    %s13 = scalar_lea.sflag [#allocation6], 1
    %14 = vsyncpa %s13, 0
    %15 = vsyncpa [#allocation4], 0
    %s16 = scalar_lea.sflag [#allocation4], 1
    %17 = vsyncpa %s16, 0
    %18 = vsyncpa [#allocation9], 0
    %s19 = scalar_lea.sflag [#allocation9], 1
    %20 = vsyncpa %s19, 0
    loop: start=0, step=1, limit=6
    $region2: #{tpu_custom_call.1} parent=1 // loop_pre_header
      _
    $region3: #{tpu_custom_call.1} parent=1 // loop_header
      %s22 = sphi 0, %s26
      %p23 = scmp.ge.s32.totalorder %s22, 6
      %s29 = sphi 0, %s48
      %s30 = sphi 0, %s44
      %s31 = sphi 0, %s40
      %s32 = sphi 0, %s29
      %s33 = sphi 0, %s30
      %s34 = sphi 0, %s31
      %s35 = sphi 0, %s32
      %s36 = sphi 0, %s33
      %s37 = sphi 0, %s34
      %s59 = sphi 0, %s61
      %s62 = sphi 0, %s59
      %s63 = sphi 0, %s62
      %s79 = sphi 0, %s63
      %s93 = sphi 0, %s95
      %s96 = sphi 0, %s93
      %s97 = sphi 0, %s96
      %s113 = sphi 0, %s97
      %s119 = sphi 0, %s121
      %s122 = sphi 0, %s119
      %s123 = sphi 0, %s122
      %s139 = sphi 0, %s123
      %s145 = sphi 0, %s147
      %s148 = sphi 0, %s145
      %s149 = sphi 0, %s148
      %s165 = sphi 0, %s149
    $region4: #{tpu_custom_call.1} parent=1 // loop_header_branch
      %25 = sbr.rel (%p23) target = $region8
    $region5: #{tpu_custom_call.1} parent=1 // loop_body
      %s27 = ssub.s32 %s22, 1
      %s28 = ssub.s32 %s22, 2
      %s38 = sadd.s32 1, %s31
      %p39 = scmp.ge.s32.totalorder %s38, 1
      %s40 = scalar_select %p39, 0, %s38
      %s41 = sadd.s32 1, %s30
      %s42 = scalar_select %p39, %s41, %s30
      %p43 = scmp.ge.s32.totalorder %s42, 2
      %s44 = scalar_select %p43, 0, %s42
      %s45 = sadd.s32 1, %s29
      %s46 = scalar_select %p43, %s45, %s29
      %p47 = scmp.ge.s32.totalorder %s46, 2
      %s48 = scalar_select %p47, 0, %s46
      %s49 = sadd.s32 %s29, %s31
      %p50 = scmp.lt.s32.totalorder %s49, 0
      %s51 = scalar_select %p50, %s49, 0
      %s52 = sadd.s32 %s48, %s40
      %p53 = scmp.lt.s32.totalorder %s52, 0
      %s54 = scalar_select %p53, %s52, 0
      %s55 = ssub.s32 %s30, %s44
      %s56 = ssub.s32 %s51, %s54
      %s57 = sor.u32 %s55, %s56
      %p58 = scmp.eq.s32.totalorder %s57, 0
      %s60 = sadd.s32 %s59, 1
      %s61 = scalar_select %p58, %s59, %s60
      %p64 = pneg %p58
      %p65 = scmp.eq.s32.totalorder %s22, 3
      %p66 = por %p64, %p65
      %p67 = scmp.ne.s32.totalorder %s59, %s62
      %p68 = scmp.eq.s32.totalorder %s22, 0
      %p69 = por %p67, %p68
      %p70 = scmp.ne.s32.totalorder %s59, %s62
      %p71 = scmp.eq.s32.totalorder %s27, 3
      %p72 = por %p70, %p71
      %p73 = scmp.ne.s32.totalorder %s62, %s63
      %p74 = scmp.eq.s32.totalorder %s27, 0
      %p75 = por %p73, %p74
      %p76 = scmp.ne.s32.totalorder %s62, %s63
      %p77 = scmp.eq.s32.totalorder %s28, 3
      %p78 = por %p76, %p77
      %p80 = scmp.ne.s32.totalorder %s63, %s79
      %p81 = scmp.eq.s32.totalorder %s28, 0
      %p82 = por %p80, %p81
      %s83 = sadd.s32 %s29, %s31
      %p84 = scmp.lt.s32.totalorder %s83, 0
      %s85 = scalar_select %p84, %s83, 0
      %s86 = sadd.s32 %s48, %s40
      %p87 = scmp.lt.s32.totalorder %s86, 0
      %s88 = scalar_select %p87, %s86, 0
      %s89 = ssub.s32 %s30, %s44
      %s90 = ssub.s32 %s85, %s88
      %s91 = sor.u32 %s89, %s90
      %p92 = scmp.eq.s32.totalorder %s91, 0
      %s94 = sadd.s32 %s93, 1
      %s95 = scalar_select %p92, %s93, %s94
      %p98 = pneg %p92
      %p99 = scmp.eq.s32.totalorder %s22, 3
      %p100 = por %p98, %p99
      %p101 = scmp.ne.s32.totalorder %s93, %s96
      %p102 = scmp.eq.s32.totalorder %s22, 0
      %p103 = por %p101, %p102
      %p104 = scmp.ne.s32.totalorder %s93, %s96
      %p105 = scmp.eq.s32.totalorder %s27, 3
      %p106 = por %p104, %p105
      %p107 = scmp.ne.s32.totalorder %s96, %s97
      %p108 = scmp.eq.s32.totalorder %s27, 0
      %p109 = por %p107, %p108
      %p110 = scmp.ne.s32.totalorder %s96, %s97
      %p111 = scmp.eq.s32.totalorder %s28, 3
      %p112 = por %p110, %p111
      %p114 = scmp.ne.s32.totalorder %s97, %s113
      %p115 = scmp.eq.s32.totalorder %s28, 0
      %p116 = por %p114, %p115
      %s117 = ssub.s32 %s29, %s48
      %p118 = scmp.eq.s32.totalorder %s117, 0
      %s120 = sadd.s32 %s119, 1
      %s121 = scalar_select %p118, %s119, %s120
      %p124 = pneg %p118
      %p125 = scmp.eq.s32.totalorder %s22, 3
      %p126 = por %p124, %p125
      %p127 = scmp.ne.s32.totalorder %s119, %s122
      %p128 = scmp.eq.s32.totalorder %s22, 0
      %p129 = por %p127, %p128
      %p130 = scmp.ne.s32.totalorder %s119, %s122
      %p131 = scmp.eq.s32.totalorder %s27, 3
      %p132 = por %p130, %p131
      %p133 = scmp.ne.s32.totalorder %s122, %s123
      %p134 = scmp.eq.s32.totalorder %s27, 0
      %p135 = por %p133, %p134
      %p136 = scmp.ne.s32.totalorder %s122, %s123
      %p137 = scmp.eq.s32.totalorder %s28, 3
      %p138 = por %p136, %p137
      %p140 = scmp.ne.s32.totalorder %s123, %s139
      %p141 = scmp.eq.s32.totalorder %s28, 0
      %p142 = por %p140, %p141
      %s143 = ssub.s32 %s29, %s48
      %p144 = scmp.eq.s32.totalorder %s143, 0
      %s146 = sadd.s32 %s145, 1
      %s147 = scalar_select %p144, %s145, %s146
      %p150 = pneg %p144
      %p151 = scmp.eq.s32.totalorder %s22, 3
      %p152 = por %p150, %p151
      %p153 = scmp.ne.s32.totalorder %s145, %s148
      %p154 = scmp.eq.s32.totalorder %s22, 0
      %p155 = por %p153, %p154
      %p156 = scmp.ne.s32.totalorder %s145, %s148
      %p157 = scmp.eq.s32.totalorder %s27, 3
      %p158 = por %p156, %p157
      %p159 = scmp.ne.s32.totalorder %s148, %s149
      %p160 = scmp.eq.s32.totalorder %s27, 0
      %p161 = por %p159, %p160
      %p162 = scmp.ne.s32.totalorder %s148, %s149
      %p163 = scmp.eq.s32.totalorder %s28, 3
      %p164 = por %p162, %p163
      %p166 = scmp.ne.s32.totalorder %s149, %s165
      %p167 = scmp.eq.s32.totalorder %s28, 0
      %p168 = por %p166, %p167
      %p169 = scmp.le.s32.totalorder 1, %s22
      %p170 = scmp.lt.s32.totalorder %s22, 5
      %p171 = pnand %p169, %p170
      %p172 = pneg %p171
      // Predicated region
      $region9: #{tpu_custom_call.1} parent=5 // pred_check
        _
      $region10: #{tpu_custom_call.1} parent=5 // pred_check_branch
        %174 = sbr.rel (%p171) target = $region12
      $region11: #{tpu_custom_call.1} parent=5 // pred_region
        %s175 = ssub.s32 %s22, 1
      $region12: #{tpu_custom_call.1} parent=5 // pred_fallthru
        _
      %p176 = scmp.lt.s32.totalorder %s22, 4
      // Predicated region
      $region13: #{tpu_custom_call.1} parent=5 // pred_check
        %p177 = pneg %p176
      $region14: #{tpu_custom_call.1} parent=5 // pred_check_branch
        %179 = sbr.rel (%p177) target = $region16
      $region15: #{tpu_custom_call.1} parent=5 // pred_region
        // Predicated region
        $region17: #{tpu_custom_call.1} parent=15 // pred_check
          %p180 = pneg %p69
        $region18: #{tpu_custom_call.1} parent=15 // pred_check_branch
          %182 = sbr.rel (%p180) target = $region20
        $region19: #{tpu_custom_call.1} parent=15 // pred_region
          %s183 = sand.u32 %s59, 1
          %s184 = scalar_lea.sflag [#allocation3], %s183
          %s185 = sand.u32 %s59, 1
          %s186 = smul.addr %s185, 16
          %s187 = scalar_lea.vmem [#allocation2], %s186
          %s188 = sadd.s32 %s29, %s31
          %p189 = scmp.lt.s32.totalorder %s188, 0
          %s190 = scalar_select %p189, %s188, 0
          %s192 = ssub.s32 256, 256
          %193 = vsyncadd %s184, %s192
          %s194 = smul.addr %s30, 2
          %s195 = sadd.s32 %s190, %s194
          %s196 = smul.addr %s195, 128
          %s197 = scalar_lea.hbm %s0, %s196
          %s198 = sshll.u32 %s187, 4
          %s199 = int_to_ptr.vmem [resolvable:$true] %s198
          %204 = dma.hbm_to_vmem [thread:$0]  %s197, 256, %s199, %s184, 128, 128, 8
        $region20: #{tpu_custom_call.1} parent=15 // pred_fallthru
          _
        // Predicated region
        $region21: #{tpu_custom_call.1} parent=15 // pred_check
          %p205 = pneg %p103
        $region22: #{tpu_custom_call.1} parent=15 // pred_check_branch
          %207 = sbr.rel (%p205) target = $region24
        $region23: #{tpu_custom_call.1} parent=15 // pred_region
          %s208 = sand.u32 %s93, 1
          %s209 = scalar_lea.sflag [#allocation6], %s208
          %s210 = sand.u32 %s93, 1
          %s211 = smul.addr %s210, 8
          %s212 = scalar_lea.vmem [#allocation5], %s211
          %s213 = sadd.s32 %s29, %s31
          %p214 = scmp.lt.s32.totalorder %s213, 0
          %s215 = scalar_select %p214, %s213, 0
          %s217 = ssub.s32 128, 128
          %218 = vsyncadd %s209, %s217
          %s219 = sadd.s32 %s215, %s30
          %s220 = smul.addr %s219, 128
          %s221 = scalar_lea.hbm %s1, %s220
          %s223 = sshll.u32 %s212, 4
          %s224 = int_to_ptr.vmem [resolvable:$true] %s223
          %226 = dma.hbm_to_vmem [thread:$0]  %s221, 128, %s224, %s209
        $region24: #{tpu_custom_call.1} parent=15 // pred_fallthru
          _
      $region16: #{tpu_custom_call.1} parent=5 // pred_fallthru
        _
      %p227 = scmp.le.s32.totalorder 1, %s22
      %p228 = scmp.lt.s32.totalorder %s22, 5
      %p229 = pnand %p227, %p228
      %p230 = pneg %p229
      // Predicated region
      $region25: #{tpu_custom_call.1} parent=5 // pred_check
        _
      $region26: #{tpu_custom_call.1} parent=5 // pred_check_branch
        %232 = sbr.rel (%p229) target = $region28
      $region27: #{tpu_custom_call.1} parent=5 // pred_region
        %s233 = ssub.s32 %s22, 1
        %s234 = sand.u32 %s62, 1
        %s235 = scalar_lea.sflag [#allocation3], %s234
        %s236 = sand.u32 %s62, 1
        %s237 = smul.addr %s236, 16
        %s238 = scalar_lea.vmem [#allocation2], %s237
        // Predicated region
        $region29: #{tpu_custom_call.1} parent=27 // pred_check
          %p239 = pneg %p75
        $region30: #{tpu_custom_call.1} parent=27 // pred_check_branch
          %241 = sbr.rel (%p239) target = $region32
        $region31: #{tpu_custom_call.1} parent=27 // pred_region
          %242 = dma.done %s235, 256
        $region32: #{tpu_custom_call.1} parent=27 // pred_fallthru
          _
        %s243 = sand.u32 %s96, 1
        %s244 = scalar_lea.sflag [#allocation6], %s243
        %s245 = sand.u32 %s96, 1
        %s246 = smul.addr %s245, 8
        %s247 = scalar_lea.vmem [#allocation5], %s246
        // Predicated region
        $region33: #{tpu_custom_call.1} parent=27 // pred_check
          %p248 = pneg %p109
        $region34: #{tpu_custom_call.1} parent=27 // pred_check_branch
          %250 = sbr.rel (%p248) target = $region36
        $region35: #{tpu_custom_call.1} parent=27 // pred_region
          %251 = dma.done %s244, 128
        $region36: #{tpu_custom_call.1} parent=27 // pred_fallthru
          _
        %s252 = sand.u32 %s62, 1
        %s253 = scalar_lea.sflag [#allocation3], %s252
        %s254 = sand.u32 %s62, 1
        %s255 = smul.addr %s254, 16
        %s256 = scalar_lea.vmem [#allocation2], %s255
        %p257 = pneg %p75
        %p258 = pneg %p72
        %s259 = sand.u32 %s96, 1
        %s260 = scalar_lea.sflag [#allocation6], %s259
        %s261 = sand.u32 %s96, 1
        %s262 = smul.addr %s261, 8
        %s263 = scalar_lea.vmem [#allocation5], %s262
        %p264 = pneg %p109
        %p265 = pneg %p106
        %p266 = pneg %p135
        %p267 = pneg %p132
        %s268 = sand.u32 %s122, 1
        %s269 = scalar_lea.sflag [#allocation4], %s268
        %s270 = sand.u32 %s122, 1
        %s271 = smul.addr %s270, 8
        %s272 = scalar_lea.vmem [#allocation7], %s271
        %p273 = pneg %p161
        %p274 = pneg %p158
        %s275 = sand.u32 %s148, 1
        %s276 = scalar_lea.sflag [#allocation9], %s275
        %s277 = sand.u32 %s148, 1
        %s278 = smul.addr %s277, 8
        %s279 = scalar_lea.vmem [#allocation8], %s278
        %s280 = sadd.s32 %s32, %s34
        %p281 = scmp.lt.s32.totalorder %s280, 0
        %s282 = scalar_select %p281, %s280, 0
        %s283 = sadd.s32 %s32, %s34
        %p284 = scmp.lt.s32.totalorder %s283, 0
        %s285 = scalar_select %p284, %s283, 0
        %p286 = scmp.eq.s32.totalorder %s33, 0
        %p287 = scmp.eq.s32.totalorder %s34, 0
        %p288 = pnand %p286, %p287
        %p289 = pneg %p288
        // Predicated region
        $region37: #{tpu_custom_call.1} parent=27 // pred_check
          _
        $region38: #{tpu_custom_call.1} parent=27 // pred_check_branch
          %291 = sbr.rel (%p288) target = $region40
        $region39: #{tpu_custom_call.1} parent=27 // pred_region
          %292 = vst [vmem:[%s272] sm:$0xff] 0.0
          %293 = vst [vmem:[%s279] sm:$0xff] 0.0
        $region40: #{tpu_custom_call.1} parent=27 // pred_fallthru
          _
        %v294 = vld [vmem:[%s238] sm:$0xff]
        %s295 = scalar_lea.vmem %s238, 8 [#allocation2]
        %v296 = vld [vmem:[%s295] sm:$0xff]
        %v297 = vld [vmem:[%s247] sm:$0xff]
        %v298 = vcvt.s32.f32 %v297
        %s299 = sadd.s32 %s32, %s34
        %v300 = vlaneseq
        %v301 = vshrl.u32 %v300, 7
        %v302 = vlaneseq
        %v303 = vand.u32 %v302, 127
        %s304 = smul.u32 %s299, 8
        %v305 = vstv %s304
        %v306 = vadd.s32 %v305, %v301
        %v307 = vmul.u32 %v306, 128
        %v308 = vadd.s32 %v307, %v303
        %vm309 = vcmp.lt.s32.totalorder %v308, 1024
        %v310 = vsel %vm309, %v298, 0.0
        %v311 = vsub.f32 %v296, %v294
        %v312 = vmul.f32 %v310, 2.0
        %v313 = vsub.f32 1.0, %v312
        %v314 = vmul.f32 %v313, %v311
        %v315 = vmax.f32 %v314, 0.0
        %v316 = vand.u32 2147483647, %v314
        %v317 = vsub.f32 0.0, %v316
        %v318 = vmul.f32 %v317, 1.442695
        %v319 = vpow.pop %v318
        %v320 = vadd.f32 %v319, 1.0
        %v321 = vlog2.pop %v320
        %v322 = vmul.f32 %v321, 0.6931472
        %v323 = vadd.f32 %v315, %v322
        %v324 = vmul.f32 %v310, 0.25
        %v325 = vsub.f32 1.0, %v310
        %v326 = vmul.f32 %v325, 0.75
        %v327 = vadd.f32 %v324, %v326
        %v328 = vmul.f32 %v327, %v323
        %v329 = vsub.f32 0.0, %v323
        %v330 = vmul.f32 %v329, 1.442695
        %v331 = vpow.pop %v330
        %v332 = vsub.f32 1.0, %v331
        %v333 = vmul.f32 %v328, %v332
        %v334 = vmul.f32 %v333, %v332
        %v335 = vld [vmem:[%s272] sm:$0xff]
        %v336 = vsel %vm309, %v334, 0.0
        %v337 = vadd.f32 %v335, %v336
        %338 = vst [vmem:[%s272] sm:$0xff] %v337
        %v339 = vld [vmem:[%s279] sm:$0xff]
        %v340 = vadd.f32 %v339, %v310
        %341 = vst [vmem:[%s279] sm:$0xff] %v340
        %s342 = sand.u32 %s122, 1
        %s343 = scalar_lea.sflag [#allocation4], %s342
        %s344 = sand.u32 %s122, 1
        %s345 = smul.addr %s344, 8
        %s346 = scalar_lea.vmem [#allocation7], %s345
        %s347 = sand.u32 %s148, 1
        %s348 = scalar_lea.sflag [#allocation9], %s347
        %s349 = sand.u32 %s148, 1
        %s350 = smul.addr %s349, 8
        %s351 = scalar_lea.vmem [#allocation8], %s350
        // Predicated region
        $region41: #{tpu_custom_call.1} parent=27 // pred_check
          %p352 = pneg %p132
        $region42: #{tpu_custom_call.1} parent=27 // pred_check_branch
          %354 = sbr.rel (%p352) target = $region44
        $region43: #{tpu_custom_call.1} parent=27 // pred_region
          %s356 = ssub.s32 128, 128
          %357 = vsyncadd %s343, %s356
          %s358 = smul.addr %s32, 128
          %s359 = scalar_lea.hbm %s2, %s358
          %s361 = sshll.u32 %s346, 4
          %s362 = int_to_ptr.vmem [resolvable:$true] %s361
          %364 = dma.vmem_to_hbm [thread:$0]  %s362, 128, %s359, %s343
        $region44: #{tpu_custom_call.1} parent=27 // pred_fallthru
          _
        // Predicated region
        $region45: #{tpu_custom_call.1} parent=27 // pred_check
          %p365 = pneg %p158
        $region46: #{tpu_custom_call.1} parent=27 // pred_check_branch
          %367 = sbr.rel (%p365) target = $region48
        $region47: #{tpu_custom_call.1} parent=27 // pred_region
          %s369 = ssub.s32 128, 128
          %370 = vsyncadd %s348, %s369
          %s371 = smul.addr %s32, 128
          %s372 = scalar_lea.hbm %s3, %s371
          %s374 = sshll.u32 %s351, 4
          %s375 = int_to_ptr.vmem [resolvable:$true] %s374
          %377 = dma.vmem_to_hbm [thread:$0]  %s375, 128, %s372, %s348
        $region48: #{tpu_custom_call.1} parent=27 // pred_fallthru
          _
      $region28: #{tpu_custom_call.1} parent=5 // pred_fallthru
        _
      %p378 = scmp.le.s32.totalorder 2, %s22
      // Predicated region
      $region49: #{tpu_custom_call.1} parent=5 // pred_check
        %p379 = pneg %p378
      $region50: #{tpu_custom_call.1} parent=5 // pred_check_branch
        %381 = sbr.rel (%p379) target = $region52
      $region51: #{tpu_custom_call.1} parent=5 // pred_region
        %s382 = ssub.s32 %s22, 2
        // Predicated region
        $region53: #{tpu_custom_call.1} parent=51 // pred_check
          %p383 = pneg %p138
        $region54: #{tpu_custom_call.1} parent=51 // pred_check_branch
          %385 = sbr.rel (%p383) target = $region56
        $region55: #{tpu_custom_call.1} parent=51 // pred_region
          %s386 = sand.u32 %s123, 1
          %s387 = scalar_lea.sflag [#allocation4], %s386
          %s388 = sand.u32 %s123, 1
          %s389 = smul.addr %s388, 8
          %s390 = scalar_lea.vmem [#allocation7], %s389
          %391 = dma.done %s387, 128
        $region56: #{tpu_custom_call.1} parent=51 // pred_fallthru
          _
        // Predicated region
        $region57: #{tpu_custom_call.1} parent=51 // pred_check
          %p392 = pneg %p164
        $region58: #{tpu_custom_call.1} parent=51 // pred_check_branch
          %394 = sbr.rel (%p392) target = $region60
        $region59: #{tpu_custom_call.1} parent=51 // pred_region
          %s395 = sand.u32 %s149, 1
          %s396 = scalar_lea.sflag [#allocation9], %s395
          %s397 = sand.u32 %s149, 1
          %s398 = smul.addr %s397, 8
          %s399 = scalar_lea.vmem [#allocation8], %s398
          %400 = dma.done %s396, 128
        $region60: #{tpu_custom_call.1} parent=51 // pred_fallthru
          _
      $region52: #{tpu_custom_call.1} parent=5 // pred_fallthru
        _
    $region6: #{tpu_custom_call.1} parent=1 // loop_footer
      %s26 = sadd.s32 1, %s22
    $region7: #{tpu_custom_call.1} parent=1 // loop_footer_branch
      %21 = sbr.rel target = $region3
    $region8: #{tpu_custom_call.1} parent=1 // loop_exit
      _
    %401 = vsyncpa [#allocation3], 1
    %s402 = scalar_lea.sflag [#allocation3], 1
    %403 = vsyncpa %s402, 1
    %404 = vsyncpa [#allocation6], 1
    %s405 = scalar_lea.sflag [#allocation6], 1
    %406 = vsyncpa %s405, 1
    %407 = vsyncpa [#allocation4], 1
    %s408 = scalar_lea.sflag [#allocation4], 1
    %409 = vsyncpa %s408, 1
    %410 = vsyncpa [#allocation9], 1
    %s411 = scalar_lea.sflag [#allocation9], 1
    %412 = vsyncpa %s411, 1

</llo_original>
